<compile_context>
chip_gen: v7x
topology: tpu7x:2x2x1
jax: 0.10.0
libtpu: 0.0.40
codegen_flags: <defaults>
</compile_context>

<pallas_src>
import jax
import jax.numpy as jnp
from jax.experimental import pallas as pl
from jax.experimental.pallas import tpu as pltpu


# ----------------------------------------------------------------------------
# Pallas kernel factory
# ----------------------------------------------------------------------------
def _make_iou_kernel(half: bool, exact_div: bool):
    """Build the pairwise-IoU kernel.

    Refs: dt_ref (TN,4), gt_t_ref (4,TM), out_ref (TN,TM),
          scratch x1/y1/x2/y2/area (TN,1) f32.
    """

    def kernel(dt_ref, gt_t_ref, out_ref, x1_s, y1_s, x2_s, y2_s, area_s):
        # Hoist per-dt-tile work (lane extraction from the packed (TN,4)
        # layout + area) out of the fast j axis: only recompute when a new
        # dt tile arrives (j == 0 for each i).
        @pl.when(pl.program_id(1) == 0)
        def _():
            a = dt_ref[...]                                   # (TN, 4)
            x1_s[...] = a[:, 0:1]
            y1_s[...] = a[:, 1:2]
            x2_s[...] = a[:, 2:3]
            y2_s[...] = a[:, 3:4]
            area_s[...] = (a[:, 2:3] - a[:, 0:1]) * (a[:, 3:4] - a[:, 1:2])

        bt = gt_t_ref[...]                                    # (4, TM)
        bx1 = bt[0:1, :]
        by1 = bt[1:2, :]
        bx2 = bt[2:3, :]
        by2 = bt[3:4, :]

        ax1 = x1_s[...]                                       # (TN, 1)
        ay1 = y1_s[...]
        ax2 = x2_s[...]
        ay2 = y2_s[...]
        area_a = area_s[...]                                  # (TN, 1)

        w_int = jnp.maximum(jnp.minimum(ax2, bx2) - jnp.maximum(ax1, bx1), 0.0)
        h_int = jnp.maximum(jnp.minimum(ay2, by2) - jnp.maximum(ay1, by1), 0.0)
        inter = w_int * h_int                                 # (TN, TM)

        if half:
            # 'half_iou': intersection / area(dt).  Union stays (TN, 1) so
            # the reciprocal is done once per dt row, not per (row, col).
            union = jnp.maximum(area_a, 1e-8)
        else:
            area_b = (bx2 - bx1) * (by2 - by1)                # (1, TM)
            union = jnp.maximum(area_a + area_b - inter, 1e-8)

        if exact_div:
            res = inter / union
        else:
            # Divide -> EUP reciprocal (its own VLIW slot; VALU stays free).
            res = inter * pl.reciprocal(union, approx=True)
        out_ref[...] = res.astype(out_ref.dtype)

    return kernel


# ----------------------------------------------------------------------------
# Glue: bbox format conversion (pure JAX) + pallas_call wrapper
# ----------------------------------------------------------------------------
def _x1y1wh_to_x1y1x2y2(b):
    x1, y1, w, h = b[:, 0], b[:, 1], b[:, 2], b[:, 3]
    return jnp.stack([x1, y1, x1 + w, y1 + h], axis=1)


def _xywh_to_x1y1x2y2(b):
    cx, cy, w, h = b[:, 0], b[:, 1], b[:, 2], b[:, 3]
    x1 = cx - 0.5 * w
    y1 = cy - 0.5 * h
    return jnp.stack([x1, y1, x1 + w, y1 + h], axis=1)


def _transfer(boxes, box_type):
    if box_type == 'x1y1wh':
        return _x1y1wh_to_x1y1x2y2(boxes)
    if box_type == 'xywh':
        return _xywh_to_x1y1x2y2(boxes)
    if box_type == 'x1y1x2y2':
        return boxes
    raise NotImplementedError('Unknown box type')


def _round_up(x, m):
    return ((x + m - 1) // m) * m


def iou_pallas(dt, gt, dt_type='x1y1x2y2', gt_type='x1y1x2y2', ioutype='iou',
               tile_n=512, tile_m=2048, out_dtype=jnp.float32,
               exact_div=False):
    """Pairwise IoU of dt:(N,4) vs gt:(M,4) -> (N,M) `out_dtype`.

    tile_n / tile_m: output tile (sublane x lane).  Defaults (512, 2048) f32
    keep the double-buffered working set ~10 MiB -> safe on v5e/v6e/v7x.
    On v5e/v6e (128 MiB physical VMEM) tile_m may be raised to 4096 for
    slightly better store streaming; do NOT copy that to v7x (64 MiB/TC).
    On store-bound v5e, out_dtype=jnp.bfloat16 halves output HBM traffic
    (IoU is in [0,1]; error comparable to the approx reciprocal).
    exact_div=True uses an exact per-element divide (parity with PyTorch)
    instead of the EUP approximate reciprocal.
    """
    ioutype = ioutype.lower()
    dt = _transfer(jnp.asarray(dt, jnp.float32), dt_type)
    gt = _transfer(jnp.asarray(gt, jnp.float32), gt_type)
    N = dt.shape[0]
    M = gt.shape[0]

    if ioutype == 'iou':
        kernel = _make_iou_kernel(half=False, exact_div=exact_div)
    elif ioutype == 'half_iou':
        kernel = _make_iou_kernel(half=True, exact_div=exact_div)
    else:
        # TODO(synk): 'giou' in the PyTorch reference is an unfinished stub (returns None).
        raise NotImplementedError('Unknown iouType')

    # Lane-dense layout: N -> sublanes (tiles multiple of 8),
    #                    M -> lanes    (tiles multiple of 128).
    tn = min(tile_n, _round_up(N, 8))
    if N > 8:
        # Guarantee >= 2 blocks along the 'parallel' N axis so v7x's two
        # TensorCores both get work even for moderate N.
        tn = min(tn, _round_up((N + 1) // 2, 8))
    tm = min(tile_m, _round_up(M, 128))

    grid = (pl.cdiv(N, tn), pl.cdiv(M, tm))
    n_pad = grid[0] * tn
    m_pad = grid[1] * tm

    # Cheap input padding only (N*4 / 4*M floats); the OUTPUT is allocated at
    # its true (N, M) shape -> no padded-output + slice copy.
    dt_p = dt if n_pad == N else jnp.zeros((n_pad, 4), jnp.float32).at[:N, :].set(dt)
    gt_t = gt.T if m_pad == M else jnp.zeros((4, m_pad), jnp.float32).at[:, :M].set(gt.T)

    out_bytes = jnp.dtype(out_dtype).itemsize
    cost = pl.CostEstimate(
        flops=13 * N * M,
        transcendentals=N * M,
        bytes_accessed=out_bytes * N * M + 16 * (N + M),
    )

    return pl.pallas_call(
        kernel,
        out_shape=jax.ShapeDtypeStruct((N, M), out_dtype),
        grid=grid,
        in_specs=[
            pl.BlockSpec((tn, 4), lambda i, j: (i, 0)),
            pl.BlockSpec((4, tm), lambda i, j: (0, j)),
        ],
        out_specs=pl.BlockSpec((tn, tm), lambda i, j: (i, j)),
        scratch_shapes=[pltpu.VMEM((tn, 1), jnp.float32)] * 5,
        compiler_params=pltpu.CompilerParams(
            # j (the fast M axis) must run 0..last for the dt-tile scratch
            # hoist -> "arbitrary"; the N axis is "parallel" for megacore.
            dimension_semantics=("parallel", "arbitrary"),
            vmem_limit_bytes=32 * 1024 * 1024,
        ),
        cost_estimate=cost,
    )(dt_p, gt_t)


# ----------------------------------------------------------------------------
# Pure-JAX references (mirror the PyTorch _iou / _iou_half) for checks
# ----------------------------------------------------------------------------
def _iou_ref(a, b):
    area = (b[:, 2] - b[:, 0]) * (b[:, 3] - b[:, 1])
    w_int = jnp.minimum(a[:, 2][:, None], b[:, 2]) - jnp.maximum(a[:, 0][:, None], b[:, 0])
    h_int = jnp.minimum(a[:, 3][:, None], b[:, 3]) - jnp.maximum(a[:, 1][:, None], b[:, 1])
    w_int = jnp.maximum(w_int, 0.0)
    h_int = jnp.maximum(h_int, 0.0)
    inter = w_int * h_int
    union = ((a[:, 2] - a[:, 0]) * (a[:, 3] - a[:, 1]))[:, None] + area - inter
    union = jnp.maximum(union, 1e-8)
    return inter / union


def _iou_half_ref(a, b):
    w_int = jnp.maximum(
        jnp.minimum(a[:, 2][:, None], b[:, 2]) - jnp.maximum(a[:, 0][:, None], b[:, 0]), 0.0)
    h_int = jnp.maximum(
        jnp.minimum(a[:, 3][:, None], b[:, 3]) - jnp.maximum(a[:, 1][:, None], b[:, 1]), 0.0)
    inter = w_int * h_int
    union = jnp.maximum(((a[:, 2] - a[:, 0]) * (a[:, 3] - a[:, 1]))[:, None], 1e-8)
    return inter / union


def _make_boxes(key, n, lo, hi, wlo, whi):
    k1, k2 = jax.random.split(key)
    xy = jax.random.uniform(k1, (n, 2), jnp.float32, lo, hi)
    wh = jax.random.uniform(k2, (n, 2), jnp.float32, wlo, whi)
    return jnp.concatenate([xy, xy + wh], axis=1)   # valid x1y1x2y2


if __name__ == "__main__":
    key = jax.random.PRNGKey(0)
    k1, k2 = jax.random.split(key)

    # ---- small, single-tile test ----
    N, M = 8, 16
    dt = _make_boxes(k1, N, 0.0, 10.0, 1.0, 6.0)
    gt = _make_boxes(k2, M, 0.0, 10.0, 1.0, 6.0)

    out = jax.block_until_ready(iou_pallas(dt, gt, ioutype='iou'))
    out_half = jax.block_until_ready(iou_pallas(dt, gt, ioutype='half_iou'))
    assert out.shape == (N, M)
    assert out_half.shape == (N, M)
    # Tolerance loosened vs exact divide because of the EUP approx reciprocal.
    assert jnp.allclose(out, _iou_ref(dt, gt), atol=5e-3, rtol=5e-3), "iou mismatch"
    assert jnp.allclose(out_half, _iou_half_ref(dt, gt), atol=5e-3, rtol=5e-3), "half_iou mismatch"

    # ---- multi-tile, ragged-edge test (N, M not multiples of the tiles) ----
    j1, j2 = jax.random.split(jax.random.PRNGKey(1))
    N2, M2 = 200, 700
    dt2 = _make_boxes(j1, N2, 0.0, 50.0, 1.0, 10.0)
    gt2 = _make_boxes(j2, M2, 0.0, 50.0, 1.0, 10.0)

    out2 = jax.block_until_ready(iou_pallas(dt2, gt2, tile_n=64, tile_m=256))
    assert out2.shape == (N2, M2)
    assert jnp.allclose(out2, _iou_ref(dt2, gt2), atol=5e-3, rtol=5e-3), \
        "multi-tile iou mismatch"

    # Exact-division mode (parity path for threshold-sensitive consumers).
    out2_exact = jax.block_until_ready(
        iou_pallas(dt2, gt2, tile_n=64, tile_m=256, exact_div=True))
    assert jnp.allclose(out2_exact, _iou_ref(dt2, gt2), atol=1e-6, rtol=1e-6), \
        "exact-div iou mismatch"

    print("KERNEL_OK")
</pallas_src>

<mosaic_0001>
module attributes {stable_mosaic.version = 11 : i64} {
  func.func @kernel(%arg0: i32, %arg1: i32, %arg2: memref<8x4xf32, #tpu.memory_space<vmem>>, %arg3: memref<4x128xf32, #tpu.memory_space<vmem>>, %arg4: memref<8x128xf32, #tpu.memory_space<vmem>>, %arg5: memref<8x1xf32, #tpu.memory_space<vmem>>, %arg6: memref<8x1xf32, #tpu.memory_space<vmem>>, %arg7: memref<8x1xf32, #tpu.memory_space<vmem>>, %arg8: memref<8x1xf32, #tpu.memory_space<vmem>>, %arg9: memref<8x1xf32, #tpu.memory_space<vmem>>) attributes {dimension_semantics = [#tpu.dimension_semantics<parallel>, #tpu.dimension_semantics<arbitrary>], iteration_bounds = array<i64: 1, 1>, scalar_prefetch = 0 : i64, scratch_operands = 5 : i64, tpu.core_type = #tpu.core_type<tc>, window_params = [{transform_indices = @transform_0, window_bounds = array<i64: 8, 4>}, {transform_indices = @transform_1, window_bounds = array<i64: 4, 128>}, {transform_indices = @transform_2, window_bounds = array<i64: 8, 128>}]} {
    %c0_i32 = arith.constant 0 : i32
    %0 = arith.cmpi eq, %arg1, %c0_i32 : i32
    %1 = arith.extui %0 : i1 to i32
    %c0_i32_0 = arith.constant 0 : i32
    %2 = arith.cmpi ne, %1, %c0_i32_0 : i32
    scf.if %2 {
      %c0_16 = arith.constant 0 : index
      %c0_17 = arith.constant 0 : index
      %44 = vector.load %arg2[%c0_16, %c0_17] : memref<8x4xf32, #tpu.memory_space<vmem>>, vector<8x4xf32>
      %45 = vector.extract_strided_slice %44 {offsets = [0, 0], sizes = [8, 1], strides = [1, 1]} : vector<8x4xf32> to vector<8x1xf32>
      %c0_18 = arith.constant 0 : index
      %c0_19 = arith.constant 0 : index
      %46 = vector.load %arg5[%c0_18, %c0_19] : memref<8x1xf32, #tpu.memory_space<vmem>>, vector<8x1xf32>
      tpu.vector_store %arg5[%c0_18, %c0_19], %45 {strides = array<i32>} : memref<8x1xf32, #tpu.memory_space<vmem>>, vector<8x1xf32>,
      %47 = vector.extract_strided_slice %44 {offsets = [0, 1], sizes = [8, 1], strides = [1, 1]} : vector<8x4xf32> to vector<8x1xf32>
      %c0_20 = arith.constant 0 : index
      %c0_21 = arith.constant 0 : index
      %48 = vector.load %arg6[%c0_20, %c0_21] : memref<8x1xf32, #tpu.memory_space<vmem>>, vector<8x1xf32>
      tpu.vector_store %arg6[%c0_20, %c0_21], %47 {strides = array<i32>} : memref<8x1xf32, #tpu.memory_space<vmem>>, vector<8x1xf32>,
      %49 = vector.extract_strided_slice %44 {offsets = [0, 2], sizes = [8, 1], strides = [1, 1]} : vector<8x4xf32> to vector<8x1xf32>
      %c0_22 = arith.constant 0 : index
      %c0_23 = arith.constant 0 : index
      %50 = vector.load %arg7[%c0_22, %c0_23] : memref<8x1xf32, #tpu.memory_space<vmem>>, vector<8x1xf32>
      tpu.vector_store %arg7[%c0_22, %c0_23], %49 {strides = array<i32>} : memref<8x1xf32, #tpu.memory_space<vmem>>, vector<8x1xf32>,
      %51 = vector.extract_strided_slice %44 {offsets = [0, 3], sizes = [8, 1], strides = [1, 1]} : vector<8x4xf32> to vector<8x1xf32>
      %c0_24 = arith.constant 0 : index
      %c0_25 = arith.constant 0 : index
      %52 = vector.load %arg8[%c0_24, %c0_25] : memref<8x1xf32, #tpu.memory_space<vmem>>, vector<8x1xf32>
      tpu.vector_store %arg8[%c0_24, %c0_25], %51 {strides = array<i32>} : memref<8x1xf32, #tpu.memory_space<vmem>>, vector<8x1xf32>,
      %53 = vector.extract_strided_slice %44 {offsets = [0, 2], sizes = [8, 1], strides = [1, 1]} : vector<8x4xf32> to vector<8x1xf32>
      %54 = vector.extract_strided_slice %44 {offsets = [0, 0], sizes = [8, 1], strides = [1, 1]} : vector<8x4xf32> to vector<8x1xf32>
      %55 = arith.subf %53, %54 : vector<8x1xf32>
      %56 = vector.extract_strided_slice %44 {offsets = [0, 3], sizes = [8, 1], strides = [1, 1]} : vector<8x4xf32> to vector<8x1xf32>
      %57 = vector.extract_strided_slice %44 {offsets = [0, 1], sizes = [8, 1], strides = [1, 1]} : vector<8x4xf32> to vector<8x1xf32>
      %58 = arith.subf %56, %57 : vector<8x1xf32>
      %59 = arith.mulf %55, %58 : vector<8x1xf32>
      %c0_26 = arith.constant 0 : index
      %c0_27 = arith.constant 0 : index
      %60 = vector.load %arg9[%c0_26, %c0_27] : memref<8x1xf32, #tpu.memory_space<vmem>>, vector<8x1xf32>
      tpu.vector_store %arg9[%c0_26, %c0_27], %59 {strides = array<i32>} : memref<8x1xf32, #tpu.memory_space<vmem>>, vector<8x1xf32>,
    } else {
    }
    %c0 = arith.constant 0 : index
    %c0_1 = arith.constant 0 : index
    %3 = vector.load %arg3[%c0, %c0_1] : memref<4x128xf32, #tpu.memory_space<vmem>>, vector<4x128xf32>
    %4 = vector.extract_strided_slice %3 {offsets = [0, 0], sizes = [1, 128], strides = [1, 1]} : vector<4x128xf32> to vector<1x128xf32>
    %5 = vector.extract_strided_slice %3 {offsets = [1, 0], sizes = [1, 128], strides = [1, 1]} : vector<4x128xf32> to vector<1x128xf32>
    %6 = vector.extract_strided_slice %3 {offsets = [2, 0], sizes = [1, 128], strides = [1, 1]} : vector<4x128xf32> to vector<1x128xf32>
    %7 = vector.extract_strided_slice %3 {offsets = [3, 0], sizes = [1, 128], strides = [1, 1]} : vector<4x128xf32> to vector<1x128xf32>
    %c0_2 = arith.constant 0 : index
    %c0_3 = arith.constant 0 : index
    %8 = vector.load %arg5[%c0_2, %c0_3] : memref<8x1xf32, #tpu.memory_space<vmem>>, vector<8x1xf32>
    %c0_4 = arith.constant 0 : index
    %c0_5 = arith.constant 0 : index
    %9 = vector.load %arg6[%c0_4, %c0_5] : memref<8x1xf32, #tpu.memory_space<vmem>>, vector<8x1xf32>
    %c0_6 = arith.constant 0 : index
    %c0_7 = arith.constant 0 : index
    %10 = vector.load %arg7[%c0_6, %c0_7] : memref<8x1xf32, #tpu.memory_space<vmem>>, vector<8x1xf32>
    %c0_8 = arith.constant 0 : index
    %c0_9 = arith.constant 0 : index
    %11 = vector.load %arg8[%c0_8, %c0_9] : memref<8x1xf32, #tpu.memory_space<vmem>>, vector<8x1xf32>
    %c0_10 = arith.constant 0 : index
    %c0_11 = arith.constant 0 : index
    %12 = vector.load %arg9[%c0_10, %c0_11] : memref<8x1xf32, #tpu.memory_space<vmem>>, vector<8x1xf32>
    %13 = vector.broadcast %10 : vector<8x1xf32> to vector<8x128xf32>
    %14 = vector.broadcast %6 : vector<1x128xf32> to vector<8x128xf32>
    %15 = arith.minimumf %13, %14 : vector<8x128xf32>
    %16 = vector.broadcast %8 : vector<8x1xf32> to vector<8x128xf32>
    %17 = vector.broadcast %4 : vector<1x128xf32> to vector<8x128xf32>
    %18 = arith.maximumf %16, %17 : vector<8x128xf32>
    %19 = arith.subf %15, %18 : vector<8x128xf32>
    %cst = arith.constant 0.000000e+00 : f32
    %20 = vector.broadcast %cst : f32 to vector<8x128xf32>
    %21 = arith.maximumf %19, %20 : vector<8x128xf32>
    %22 = vector.broadcast %11 : vector<8x1xf32> to vector<8x128xf32>
    %23 = vector.broadcast %7 : vector<1x128xf32> to vector<8x128xf32>
    %24 = arith.minimumf %22, %23 : vector<8x128xf32>
    %25 = vector.broadcast %9 : vector<8x1xf32> to vector<8x128xf32>
    %26 = vector.broadcast %5 : vector<1x128xf32> to vector<8x128xf32>
    %27 = arith.maximumf %25, %26 : vector<8x128xf32>
    %28 = arith.subf %24, %27 : vector<8x128xf32>
    %cst_12 = arith.constant 0.000000e+00 : f32
    %29 = vector.broadcast %cst_12 : f32 to vector<8x128xf32>
    %30 = arith.maximumf %28, %29 : vector<8x128xf32>
    %31 = arith.mulf %21, %30 : vector<8x128xf32>
    %32 = arith.subf %6, %4 : vector<1x128xf32>
    %33 = arith.subf %7, %5 : vector<1x128xf32>
    %34 = arith.mulf %32, %33 : vector<1x128xf32>
    %35 = vector.broadcast %12 : vector<8x1xf32> to vector<8x128xf32>
    %36 = vector.broadcast %34 : vector<1x128xf32> to vector<8x128xf32>
    %37 = arith.addf %35, %36 : vector<8x128xf32>
    %38 = arith.subf %37, %31 : vector<8x128xf32>
    %cst_13 = arith.constant 9.99999993E-9 : f32
    %39 = vector.broadcast %cst_13 : f32 to vector<8x128xf32>
    %40 = arith.maximumf %38, %39 : vector<8x128xf32>
    %41 = tpu.reciprocal %40 {approx = true} : vector<8x128xf32> -> vector<8x128xf32>
    %42 = arith.mulf %31, %41 : vector<8x128xf32>
    %c0_14 = arith.constant 0 : index
    %c0_15 = arith.constant 0 : index
    %43 = vector.load %arg4[%c0_14, %c0_15] : memref<8x128xf32, #tpu.memory_space<vmem>>, vector<8x128xf32>
    tpu.vector_store %arg4[%c0_14, %c0_15], %42 {strides = array<i32>} : memref<8x128xf32, #tpu.memory_space<vmem>>, vector<8x128xf32>,
    return
  }
  func.func @transform_0(%arg0: i32, %arg1: i32) -> (i32, i32) {
    %c0_i32 = arith.constant 0 : i32
    %c0_i32_0 = arith.constant 0 : i32
    return %arg0, %c0_i32 : i32, i32
  }
  func.func @transform_1(%arg0: i32, %arg1: i32) -> (i32, i32) {
    %c0_i32 = arith.constant 0 : i32
    %c0_i32_0 = arith.constant 0 : i32
    return %c0_i32, %arg1 : i32, i32
  }
  func.func @transform_2(%arg0: i32, %arg1: i32) -> (i32, i32) {
    %c0_i32 = arith.constant 0 : i32
    return %arg0, %arg1 : i32, i32
  }
}

</mosaic_0001>

<llo_original>
// kernel: tpu_custom_call.1
$region0: #{tpu_custom_call.1}
  #allocation0 [shape = 'u32[]', space=smem, size = 0x4, offset = 0x4, fixed_abs, tag = 'smem constant byte address 0x4 - core index']
  #allocation1 [shape = 'u32[144,128]{1,0:T(1,128)}', space=vmem, size = 0x12000, scoped, tag = 'internal scratch']
  #allocation2 [shape = 'f32[8,1]{1,0:T(8,128)}', space=vmem, size = 0x1000, scoped, tag = 'scratch operand']
  #allocation3 [shape = 'f32[8,1]{1,0:T(8,128)}', space=vmem, size = 0x1000, scoped, tag = 'scratch operand']
  #allocation4 [shape = 'f32[8,1]{1,0:T(8,128)}', space=vmem, size = 0x1000, scoped, tag = 'scratch operand']
  #allocation5 [shape = 'f32[8,1]{1,0:T(8,128)}', space=vmem, size = 0x1000, scoped, tag = 'scratch operand']
  #allocation6 [shape = 'f32[8,1]{1,0:T(8,128)}', space=vmem, size = 0x1000, scoped, tag = 'scratch operand']
  %s0 = inlined_call_operand.vmem [shape: f32[8,4], index: 0, kind: input, shape index: {}]
  %s1 = inlined_call_operand.vmem [shape: f32[4,128], index: 1, kind: input, shape index: {}]
  %s2 = inlined_call_operand.hbm [shape: f32[8,16], index: 2, kind: output, shape index: {}]
  %s3 = sld [smem:[#allocation0]]
  $region22: #{tpu_custom_call.1} parent=0
    _
  %s5 = ssub.s32 1, %s3
  %s6 = scalar_select 0, %s5, %s3
  $region1: #{tpu_custom_call.1} parent=0
    #allocation7 [shape = 'u8[4096]{0}', space=vmem, size = 0x1000, scoped, tag = 'output window, operand 0, single buffered']
    #allocation8 [shape = 's32[1]{0}', space=sflag, size = 0x4, scoped, tag = 'scoped memory for tpu_custom_call.1']
    %7 = vsyncpa [#allocation8], 0
    // Predicated region
    $region2: #{tpu_custom_call.1} parent=1 // pred_check
      _
    $region3: #{tpu_custom_call.1} parent=1 // pred_check_branch
      %9 = sbr.rel (0) target = $region5
    $region4: #{tpu_custom_call.1} parent=1 // pred_region
      _
    $region5: #{tpu_custom_call.1} parent=1 // pred_fallthru
      _
    // Predicated region
    $region6: #{tpu_custom_call.1} parent=1 // pred_check
      _
    $region7: #{tpu_custom_call.1} parent=1 // pred_check_branch
      %11 = sbr.rel (0) target = $region9
    $region8: #{tpu_custom_call.1} parent=1 // pred_region
      _
    $region9: #{tpu_custom_call.1} parent=1 // pred_fallthru
      _
    %p12 = scmp.eq.s32.totalorder 0, 0
    // Predicated region
    $region10: #{tpu_custom_call.1} parent=1 // pred_check
      %p13 = pneg %p12
    $region11: #{tpu_custom_call.1} parent=1 // pred_check_branch
      %15 = sbr.rel (%p13) target = $region13
    $region12: #{tpu_custom_call.1} parent=1 // pred_region
      %v16 = vld [vmem:[%s0] sm:$0xff]
      %vm17 = vcmask 7168
      %18 = vst.msk [vmem:[#allocation2] sm:$0xff] %vm17, %v16
      %20 = vrot.lane.b32.xlu0 %v16, 127
      %v21 = vpop.permute.xlu0 %20
      %23 = vst.msk [vmem:[#allocation3] sm:$0xff] %vm17, %v21
      %24 = vrot.lane.b32.xlu0 %v16, 126
      %v25 = vpop.permute.xlu0 %24
      %27 = vst.msk [vmem:[#allocation4] sm:$0xff] %vm17, %v25
      %28 = vrot.lane.b32.xlu0 %v16, 125
      %v29 = vpop.permute.xlu0 %28
      %31 = vst.msk [vmem:[#allocation5] sm:$0xff] %vm17, %v29
      %32 = vrot.lane.b32.xlu0 %v16, 2
      %v33 = vpop.permute.xlu0 %32
      %v35 = vsub.f32 %v16, %v33
      %37 = vrot.lane.b32.xlu0 %v35, 127
      %v38 = vpop.permute.xlu0 %37
      %v40 = vmul.f32 %v35, %v38
      %42 = vrot.lane.b32.xlu0 %v40, 126
      %v43 = vpop.permute.xlu0 %42
      %45 = vst.msk [vmem:[#allocation6] sm:$0xff] %vm17, %v43
    $region13: #{tpu_custom_call.1} parent=1 // pred_fallthru
      _
    %v46 = vld [vmem:[%s1] sm:$0xf]
    %v47 = vld [vmem:[#allocation2] sm:$0xff]
    %v48 = vld [vmem:[#allocation3] sm:$0xff]
    %v49 = vld [vmem:[#allocation4] sm:$0xff]
    %v50 = vld [vmem:[#allocation5] sm:$0xff]
    %v51 = vld [vmem:[#allocation6] sm:$0xff]
    %53 = vset.pattern.permute.xlu0 0
    %54 = vperm.xlu0 %53, %v49
    %v55 = vpop.permute.xlu0 %54
    %v57 = vlaneseq
    %v58 = vshrl.u32 %v57, 7
    %v59 = vsub.s32 2, %v58
    %v60 = vrot.slane %v46, %v59
    %v61 = vmin.f32 %v55, %v60
    %63 = vset.pattern.permute.xlu0 0
    %64 = vperm.xlu0 %63, %v47
    %v65 = vpop.permute.xlu0 %64
    %v67 = vlaneseq
    %v68 = vshrl.u32 %v67, 7
    %v69 = vsub.s32 0, %v68
    %v70 = vrot.slane %v46, %v69
    %v71 = vmax.f32 %v65, %v70
    %v72 = vsub.f32 %v61, %v71
    %v73 = vmax.f32 %v72, 0.0
    %75 = vset.pattern.permute.xlu0 0
    %76 = vperm.xlu0 %75, %v50
    %v77 = vpop.permute.xlu0 %76
    %v79 = vlaneseq
    %v80 = vshrl.u32 %v79, 7
    %v81 = vsub.s32 3, %v80
    %v82 = vrot.slane %v46, %v81
    %v83 = vmin.f32 %v77, %v82
    %85 = vset.pattern.permute.xlu0 0
    %86 = vperm.xlu0 %85, %v48
    %v87 = vpop.permute.xlu0 %86
    %v89 = vlaneseq
    %v90 = vshrl.u32 %v89, 7
    %v91 = vsub.s32 1, %v90
    %v92 = vrot.slane %v46, %v91
    %v93 = vmax.f32 %v87, %v92
    %v94 = vsub.f32 %v83, %v93
    %v95 = vmax.f32 %v94, 0.0
    %v96 = vmul.f32 %v73, %v95
    %v98 = vrot.slane %v46, 6
    %v100 = vsub.f32 %v46, %v98
    %v102 = vrot.slane %v100, 1
    %v104 = vmul.f32 %v100, %v102
    %106 = vset.pattern.permute.xlu0 0
    %107 = vperm.xlu0 %106, %v51
    %v108 = vpop.permute.xlu0 %107
    %v110 = vlaneseq
    %v111 = vshrl.u32 %v110, 7
    %v112 = vsub.s32 2, %v111
    %v113 = vrot.slane %v104, %v112
    %v114 = vadd.f32 %v108, %v113
    %v115 = vsub.f32 %v114, %v96
    %v116 = vmax.f32 %v115, 1e-08
    %v117 = vrcp.pop %v116
    %v118 = vmul.f32 %v96, %v117
    %119 = vst [vmem:[#allocation7] sm:$0xff] %v118
    // Predicated region
    $region14: #{tpu_custom_call.1} parent=1 // pred_check
      _
    $region15: #{tpu_custom_call.1} parent=1 // pred_check_branch
      %121 = sbr.rel (0) target = $region17
    $region16: #{tpu_custom_call.1} parent=1 // pred_region
      %s123 = ssub.s32 128, 128
      %124 = vsyncadd [#allocation8], %s123
      %s126 = sshll.u32 [#allocation7], 4
      %s127 = int_to_ptr.vmem [resolvable:$true] %s126
      %129 = dma.vmem_to_hbm [thread:$0]  %s127, 128, %s2, [#allocation8]
    $region17: #{tpu_custom_call.1} parent=1 // pred_fallthru
      _
    // Predicated region
    $region18: #{tpu_custom_call.1} parent=1 // pred_check
      _
    $region19: #{tpu_custom_call.1} parent=1 // pred_check_branch
      %131 = sbr.rel (0) target = $region21
    $region20: #{tpu_custom_call.1} parent=1 // pred_region
      %132 = dma.done [#allocation8], 128
    $region21: #{tpu_custom_call.1} parent=1 // pred_fallthru
      _
    %133 = vsyncpa [#allocation8], 1

</llo_original>
